<compile_context>
chip_gen: v7x
topology: tpu7x:2x2x1
jax: 0.10.0
libtpu: 0.0.40
codegen_flags: <defaults>
</compile_context>

<pallas_src>
import functools

import numpy as np
import jax
import jax.numpy as jnp
from jax.experimental import pallas as pl
from jax.experimental.pallas import tpu as pltpu


_VMEM_LIMIT = 48 * 1024 * 1024  # leave headroom below v7x's 64 MiB physical VMEM


def _tile(dim, candidates=(512, 256, 128)):
    """Largest candidate tile that exactly divides `dim`; otherwise the full
    dimension (full-extent blocks always satisfy the (8,128) constraint and only
    happen for small dims like the demo's hidden=32)."""
    for c in candidates:
        if c <= dim and dim % c == 0:
            return c
    return dim


# --------------------------------------------------------------------------
# Pallas kernels
# --------------------------------------------------------------------------

def _linear_kernel(x_ref, w_ref, b_ref, o_ref, acc_ref):
    # tiled y = x @ w + b ; w pre-transposed (K, N) bf16, f32 accumulation, bf16 out
    @pl.when(pl.program_id(2) == 0)
    def _():
        acc_ref[...] = jnp.zeros_like(acc_ref)

    acc_ref[...] += jnp.dot(
        x_ref[...].astype(jnp.bfloat16), w_ref[...],
        preferred_element_type=jnp.float32)

    @pl.when(pl.program_id(2) == pl.num_programs(2) - 1)
    def _():
        o_ref[...] = (acc_ref[...] + b_ref[...]).astype(o_ref.dtype)


def _linear_residual_kernel(x_ref, w_ref, b_ref, r_ref, o_ref, acc_ref):
    # tiled y = x @ w + b + residual (residual add fused into the epilogue)
    @pl.when(pl.program_id(2) == 0)
    def _():
        acc_ref[...] = jnp.zeros_like(acc_ref)

    acc_ref[...] += jnp.dot(
        x_ref[...].astype(jnp.bfloat16), w_ref[...],
        preferred_element_type=jnp.float32)

    @pl.when(pl.program_id(2) == pl.num_programs(2) - 1)
    def _():
        o_ref[...] = (acc_ref[...] + b_ref[...] +
                      r_ref[...].astype(jnp.float32)).astype(o_ref.dtype)


def _ffn_kernel(x_ref, w1_ref, b1_ref, w2_ref, b2_ref, r_ref, o_ref, acc_ref):
    # fused fc2(relu(fc1(x))) + residual, with the ff_hidden axis tiled as the
    # reduction grid axis; intermediate chunk stays in VMEM (bf16 for the MXU).
    @pl.when(pl.program_id(1) == 0)
    def _():
        acc_ref[...] = jnp.zeros_like(acc_ref)

    h = jnp.dot(x_ref[...].astype(jnp.bfloat16), w1_ref[...],
                preferred_element_type=jnp.float32) + b1_ref[...]
    h = jnp.maximum(h, 0.0).astype(jnp.bfloat16)
    acc_ref[...] += jnp.dot(h, w2_ref[...], preferred_element_type=jnp.float32)

    @pl.when(pl.program_id(1) == pl.num_programs(1) - 1)
    def _():
        o_ref[...] = (acc_ref[...] + b2_ref[...] +
                      r_ref[...].astype(jnp.float32)).astype(o_ref.dtype)


def _ln_stats_kernel(x_ref, mean_ref, rstd_ref, sum_acc, sq_acc, *, inv_n):
    # pass 1 of F.layer_norm(x, x.shape): global sum / sum-of-squares reduction
    @pl.when(pl.program_id(0) == 0)
    def _():
        sum_acc[...] = jnp.zeros_like(sum_acc)
        sq_acc[...] = jnp.zeros_like(sq_acc)

    x = x_ref[...].astype(jnp.float32)
    sum_acc[...] += jnp.sum(x, keepdims=True)
    sq_acc[...] += jnp.sum(x * x, keepdims=True)

    @pl.when(pl.program_id(0) == pl.num_programs(0) - 1)
    def _():
        mean = sum_acc[...] * inv_n
        var = sq_acc[...] * inv_n - mean * mean
        mean_ref[...] = mean
        rstd_ref[...] = jax.lax.rsqrt(var + 1e-5)


def _ln_apply_kernel(x_ref, mean_ref, rstd_ref, o_ref):
    # pass 2: (x - mean) * rstd, pipelined over lane-dense tiles, bf16 out
    x = x_ref[...].astype(jnp.float32)
    o_ref[...] = ((x - mean_ref[...]) * rstd_ref[...]).astype(o_ref.dtype)


def _attn_kernel(q_ref, k_ref, v_ref, o_ref, *, scale):
    # q/k/v blocks: (gb, Sp, E) bf16 — gb (batch*head) slabs per grid step,
    # E = hidden (the module's quirky head view), contraction over E.
    q = q_ref[...].astype(jnp.bfloat16)
    k = k_ref[...].astype(jnp.bfloat16)
    v = v_ref[...].astype(jnp.bfloat16)
    energy = jnp.einsum('bqe,bke->bqk', q, k,
                        preferred_element_type=jnp.float32) * scale
    m = jnp.max(energy, axis=-1, keepdims=True)
    e = jnp.exp(energy - m)
    p = e * pl.reciprocal(jnp.sum(e, axis=-1, keepdims=True), approx=True)
    o_ref[...] = jnp.einsum('bqk,bke->bqe', p.astype(jnp.bfloat16), v,
                            preferred_element_type=jnp.float32).astype(o_ref.dtype)


# --------------------------------------------------------------------------
# Pallas wrappers
# --------------------------------------------------------------------------

def pallas_linear(x2d, w_t, b, residual=None):
    """y = x2d @ w_t + b [+ residual], bf16 out.  w_t pre-transposed (K, N) bf16."""
    M, K = x2d.shape
    N = w_t.shape[1]
    tm, tn = _tile(M), _tile(N)
    tk = _tile(K, (256, 128))
    grid = (M // tm, N // tn, K // tk)
    b2 = b.reshape(1, N)

    in_specs = [
        pl.BlockSpec((tm, tk), lambda i, j, k: (i, k)),
        pl.BlockSpec((tk, tn), lambda i, j, k: (k, j)),
        pl.BlockSpec((1, tn), lambda i, j, k: (0, j)),
    ]
    args = [x2d, w_t, b2]
    if residual is None:
        kernel = _linear_kernel
    else:
        kernel = _linear_residual_kernel
        in_specs.append(pl.BlockSpec((tm, tn), lambda i, j, k: (i, j)))
        args.append(residual)

    return pl.pallas_call(
        kernel,
        grid=grid,
        in_specs=in_specs,
        out_specs=pl.BlockSpec((tm, tn), lambda i, j, k: (i, j)),
        out_shape=jax.ShapeDtypeStruct((M, N), jnp.bfloat16),
        scratch_shapes=[pltpu.VMEM((tm, tn), jnp.float32)],
        compiler_params=pltpu.CompilerParams(
            dimension_semantics=("parallel", "parallel", "arbitrary"),
            vmem_limit_bytes=_VMEM_LIMIT),
    )(*args)


def pallas_ffn(x2d, w1_t, b1, w2_t, b2, residual):
    """residual + fc2(relu(fc1(x2d))), ff_hidden tiled as a reduction grid axis."""
    M, Hd = x2d.shape
    F = w1_t.shape[1]
    tm = _tile(M)
    tf = _tile(F)
    grid = (M // tm, F // tf)
    return pl.pallas_call(
        _ffn_kernel,
        grid=grid,
        in_specs=[
            pl.BlockSpec((tm, Hd), lambda i, f: (i, 0)),
            pl.BlockSpec((Hd, tf), lambda i, f: (0, f)),
            pl.BlockSpec((1, tf), lambda i, f: (0, f)),
            pl.BlockSpec((tf, Hd), lambda i, f: (f, 0)),
            pl.BlockSpec((1, Hd), lambda i, f: (0, 0)),
            pl.BlockSpec((tm, Hd), lambda i, f: (i, 0)),
        ],
        out_specs=pl.BlockSpec((tm, Hd), lambda i, f: (i, 0)),
        out_shape=jax.ShapeDtypeStruct((M, Hd), jnp.bfloat16),
        scratch_shapes=[pltpu.VMEM((tm, Hd), jnp.float32)],
        compiler_params=pltpu.CompilerParams(
            dimension_semantics=("parallel", "arbitrary"),
            vmem_limit_bytes=_VMEM_LIMIT),
    )(x2d, w1_t, b1.reshape(1, F), w2_t, b2.reshape(1, Hd), residual)


def pallas_layernorm(x2d):
    """F.layer_norm(x, x.shape): normalization over ALL elements, eps=1e-5,
    no affine.  Two tiled passes over a lane-dense flat view."""
    M, Hd = x2d.shape
    total = M * Hd
    W = None
    for w in (512, 256, 128):          # lane-dense view when possible
        if total % w == 0:
            W = w
            break
    if W is None:
        rows, W, xv = M, Hd, x2d
    else:
        rows = total // W
        xv = x2d.reshape(rows, W)
    tr = _tile(rows, (256, 128, 64, 32, 16, 8))
    grid = (rows // tr,)
    stat = jax.ShapeDtypeStruct((1, 1), jnp.float32)

    mean, rstd = pl.pallas_call(
        functools.partial(_ln_stats_kernel, inv_n=1.0 / float(total)),
        grid=grid,
        in_specs=[pl.BlockSpec((tr, W), lambda i: (i, 0))],
        out_specs=(pl.BlockSpec((1, 1), lambda i: (0, 0)),
                   pl.BlockSpec((1, 1), lambda i: (0, 0))),
        out_shape=(stat, stat),
        scratch_shapes=[pltpu.VMEM((1, 1), jnp.float32),
                        pltpu.VMEM((1, 1), jnp.float32)],
        compiler_params=pltpu.CompilerParams(
            dimension_semantics=("arbitrary",),
            vmem_limit_bytes=_VMEM_LIMIT),
    )(xv)

    out = pl.pallas_call(
        _ln_apply_kernel,
        grid=grid,
        in_specs=[pl.BlockSpec((tr, W), lambda i: (i, 0)),
                  pl.BlockSpec((1, 1), lambda i: (0, 0)),
                  pl.BlockSpec((1, 1), lambda i: (0, 0))],
        out_specs=pl.BlockSpec((tr, W), lambda i: (i, 0)),
        out_shape=jax.ShapeDtypeStruct((rows, W), jnp.bfloat16),
        compiler_params=pltpu.CompilerParams(
            dimension_semantics=("parallel",),
            vmem_limit_bytes=_VMEM_LIMIT),
    )(xv, mean, rstd)
    return out.reshape(M, Hd)


def pallas_attention_core(q_heads, k_heads, v_heads, head_dim):
    """softmax(q @ k^T / sqrt(head_dim)) @ v over a flattened (B*heads, Sp, E)
    layout; several (batch, head) slabs per grid step (fatter blocks)."""
    BH, Sp, E = q_heads.shape
    slab_bytes = Sp * E * 2                      # one bf16 slab
    gb = BH
    if gb * slab_bytes * 10 > (8 << 20):         # keep q/k/v/out double-buffers modest
        gb = 1
        for cand in (256, 128, 64, 32, 16, 8):
            if BH % cand == 0 and cand * slab_bytes * 10 <= (8 << 20):
                gb = cand
                break
    kernel = functools.partial(_attn_kernel, scale=float(1.0 / np.sqrt(head_dim)))
    spec = pl.BlockSpec((gb, Sp, E), lambda i: (i, 0, 0))
    return pl.pallas_call(
        kernel,
        grid=(BH // gb,),
        in_specs=[spec, spec, spec],
        out_specs=spec,
        out_shape=jax.ShapeDtypeStruct((BH, Sp, E), jnp.bfloat16),
        compiler_params=pltpu.CompilerParams(
            dimension_semantics=("parallel",),
            vmem_limit_bytes=_VMEM_LIMIT),
    )(q_heads, k_heads, v_heads)


# --------------------------------------------------------------------------
# Model forward (mirrors the PyTorch module exactly; dropout == identity)
# --------------------------------------------------------------------------

def attention_forward(x2d, src_mask, p, heads, S, B, Hd):
    head_dim = Hd // heads
    assert heads * head_dim == Hd, "feature dimension is not divisible by heads"
    assert S % heads == 0, "module's head view requires seq_len divisible by heads"
    # TODO(synk): src_mask masked_fill branch not implemented; src_mask=None only.
    assert src_mask is None

    # Fused Q/K/V projection: one matmul producing (S*B, 3*Hd) bf16, then split.
    qkv = pallas_linear(x2d, p["wqkv_t"], p["bqkv"]).reshape(S, B, 3 * Hd)
    Sp = S // heads

    def split_heads(t):
        # Reproduces the module's quirky view(batch, -1, heads, feature_size):
        # heads[b, h, sp, :] = t[sp*heads + h, b, :]; flattened to (B*heads, Sp, Hd).
        return jnp.transpose(t.reshape(Sp, heads, B, Hd), (2, 1, 0, 3)).reshape(
            B * heads, Sp, Hd)

    q_h = split_heads(qkv[..., :Hd])
    k_h = split_heads(qkv[..., Hd:2 * Hd])
    v_h = split_heads(qkv[..., 2 * Hd:])
    # TODO(synk): the head split/un-split permutes still run as XLA transposes;
    # folding them into BlockSpec addressing needs strided (stride=heads) row
    # gathers that index_map cannot express.

    v_att = pallas_attention_core(q_h, k_h, v_h, head_dim)        # (B*heads, Sp, Hd)
    v_att = v_att.reshape(B, heads, Sp, Hd)
    # reproduce v_att.permute(2, 0, 1, 3).reshape(-1, batch, feature) verbatim
    v_att = jnp.transpose(v_att, (2, 0, 1, 3)).reshape(-1, B, Hd)

    # Output projection with the residual (+x) fused into its epilogue.
    return pallas_linear(v_att.reshape(S * B, Hd), p["fc_wt"], p["fc_b"],
                         residual=x2d)                            # (S*B, Hd) bf16


def subencoder_forward(x2d, src_mask, p, heads, S, B, Hd):
    att_plus_res = attention_forward(x2d, src_mask, p, heads, S, B, Hd)
    middle = pallas_layernorm(att_plus_res)                 # layer_norm(att + x, x.shape)
    ffn_plus_res = pallas_ffn(middle, p["fc1_wt"], p["fc1_b"],
                              p["fc2_wt"], p["fc2_b"], residual=middle)
    return pallas_layernorm(ffn_plus_res)                   # layer_norm(middle + fc, ...)


def encoder_forward(tokens, src_mask, params, heads):
    S, B = tokens.shape
    Hd = params["emb"].shape[1]
    pos = jnp.broadcast_to(jnp.arange(S)[:, None], (S, B))
    x = params["emb"][tokens] * np.sqrt(Hd) + params["pos_emb"][pos]
    # dropout -> identity (eval-mode forward)
    x2d = x.reshape(S * B, Hd).astype(jnp.bfloat16)   # bf16 activations between kernels
    for lp in params["layers"]:
        x2d = subencoder_forward(x2d, src_mask, lp, heads, S, B, Hd)
    return x2d.reshape(S, B, Hd).astype(jnp.float32)


# --------------------------------------------------------------------------
# Deterministic parameter init (PyTorch-style init, repacked for TPU:
# weights pre-transposed to (in, out) and stored bf16, Q/K/V fused; biases f32)
# --------------------------------------------------------------------------

def _init_linear(key, in_dim, out_dim):
    k1, k2 = jax.random.split(key)
    bound = 1.0 / np.sqrt(in_dim)
    w = jax.random.uniform(k1, (out_dim, in_dim), jnp.float32, -bound, bound)
    b = jax.random.uniform(k2, (out_dim,), jnp.float32, -bound, bound)
    return w, b


def _pack(w):
    """PyTorch (out, in) f32 -> pre-transposed (in, out) bf16 for the MXU."""
    return jnp.transpose(w).astype(jnp.bfloat16)


def init_encoder_params(key, vocab, hidden, ff_hidden, nx, max_length):
    keys = jax.random.split(key, 2 + nx)
    params = {
        "emb": jax.random.normal(keys[0], (vocab, hidden), jnp.float32),
        "pos_emb": jax.random.normal(keys[1], (max_length, hidden), jnp.float32),
        "layers": [],
    }
    for i in range(nx):
        lk = jax.random.split(keys[2 + i], 6)
        wq_w, wq_b = _init_linear(lk[0], hidden, hidden)
        wk_w, wk_b = _init_linear(lk[1], hidden, hidden)
        wv_w, wv_b = _init_linear(lk[2], hidden, hidden)
        fc_w, fc_b = _init_linear(lk[3], hidden, hidden)
        fc1_w, fc1_b = _init_linear(lk[4], hidden, ff_hidden)
        fc2_w, fc2_b = _init_linear(lk[5], ff_hidden, hidden)
        params["layers"].append(dict(
            wqkv_t=jnp.concatenate([_pack(wq_w), _pack(wk_w), _pack(wv_w)], axis=1),
            bqkv=jnp.concatenate([wq_b, wk_b, wv_b], axis=0),
            fc_wt=_pack(fc_w), fc_b=fc_b,
            fc1_wt=_pack(fc1_w), fc1_b=fc1_b,
            fc2_wt=_pack(fc2_w), fc2_b=fc2_b,
        ))
    return params


# --------------------------------------------------------------------------
# Demo
# --------------------------------------------------------------------------

if __name__ == "__main__":
    VOCAB, HIDDEN, FF_HIDDEN = 50, 32, 64
    HEADS, NX, MAX_LEN = 8, 2, 100
    SEQ, BATCH = 16, 2          # SEQ must be divisible by HEADS (module's head reshape)

    key = jax.random.PRNGKey(0)
    pkey, tkey = jax.random.split(key)
    params = init_encoder_params(pkey, VOCAB, HIDDEN, FF_HIDDEN, NX, MAX_LEN)
    tokens = jax.random.randint(tkey, (SEQ, BATCH), 0, VOCAB, dtype=jnp.int32)

    out = encoder_forward(tokens, None, params, HEADS)
    out = jax.block_until_ready(out)

    assert out.shape == (SEQ, BATCH, HIDDEN)
    assert bool(jnp.all(jnp.isfinite(out)))
    print("KERNEL_OK")
</pallas_src>

<mosaic_0001>
module attributes {stable_mosaic.version = 11 : i64} {
  func.func @_linear_kernel(%arg0: i32, %arg1: i32, %arg2: i32, %arg3: memref<32x32xbf16, #tpu.memory_space<vmem>>, %arg4: memref<32x96xbf16, #tpu.memory_space<vmem>>, %arg5: memref<1x96xf32, #tpu.memory_space<vmem>>, %arg6: memref<32x96xbf16, #tpu.memory_space<vmem>>, %arg7: memref<32x96xf32, #tpu.memory_space<vmem>>) attributes {dimension_semantics = [#tpu.dimension_semantics<parallel>, #tpu.dimension_semantics<parallel>, #tpu.dimension_semantics<arbitrary>], iteration_bounds = array<i64: 1, 1, 1>, scalar_prefetch = 0 : i64, scratch_operands = 1 : i64, tpu.core_type = #tpu.core_type<tc>, window_params = [{transform_indices = @transform_0, window_bounds = array<i64: 32, 32>}, {transform_indices = @transform_1, window_bounds = array<i64: 32, 96>}, {transform_indices = @transform_2, window_bounds = array<i64: 1, 96>}, {transform_indices = @transform_3, window_bounds = array<i64: 32, 96>}]} {
    %c0_i32 = arith.constant 0 : i32
    %0 = arith.cmpi eq, %arg2, %c0_i32 : i32
    %1 = arith.extui %0 : i1 to i32
    %c0_i32_0 = arith.constant 0 : i32
    %2 = arith.cmpi ne, %1, %c0_i32_0 : i32
    scf.if %2 {
      %cst_10 = arith.constant 0.000000e+00 : f32
      %12 = vector.broadcast %cst_10 : f32 to vector<32x96xf32>
      %c0_11 = arith.constant 0 : index
      %c0_12 = arith.constant 0 : index
      %13 = vector.load %arg7[%c0_11, %c0_12] : memref<32x96xf32, #tpu.memory_space<vmem>>, vector<32x96xf32>
      tpu.vector_store %arg7[%c0_11, %c0_12], %12 {strides = array<i32>} : memref<32x96xf32, #tpu.memory_space<vmem>>, vector<32x96xf32>,
    } else {
    }
    %c0 = arith.constant 0 : index
    %c0_1 = arith.constant 0 : index
    %3 = vector.load %arg7[%c0, %c0_1] : memref<32x96xf32, #tpu.memory_space<vmem>>, vector<32x96xf32>
    %c0_2 = arith.constant 0 : index
    %c0_3 = arith.constant 0 : index
    %4 = vector.load %arg3[%c0_2, %c0_3] : memref<32x32xbf16, #tpu.memory_space<vmem>>, vector<32x32xbf16>
    %c0_4 = arith.constant 0 : index
    %c0_5 = arith.constant 0 : index
    %5 = vector.load %arg4[%c0_4, %c0_5] : memref<32x96xbf16, #tpu.memory_space<vmem>>, vector<32x96xbf16>
    %cst = arith.constant dense<0.000000e+00> : vector<32x96xf32>
    %6 = tpu.matmul %4, %5, %cst {dimension_numbers = #tpu.dot_dimension_numbers<[1], [0], [0], [1], [0, 0, 1, 1], [], []>} : vector<32x32xbf16>, vector<32x96xbf16>, vector<32x96xf32> -> vector<32x96xf32>
    %7 = arith.addf %3, %6 : vector<32x96xf32>
    %c0_6 = arith.constant 0 : index
    %c0_7 = arith.constant 0 : index
    %8 = vector.load %arg7[%c0_6, %c0_7] : memref<32x96xf32, #tpu.memory_space<vmem>>, vector<32x96xf32>
    tpu.vector_store %arg7[%c0_6, %c0_7], %7 {strides = array<i32>} : memref<32x96xf32, #tpu.memory_space<vmem>>, vector<32x96xf32>,
    %c0_i32_8 = arith.constant 0 : i32
    %9 = arith.cmpi eq, %arg2, %c0_i32_8 : i32
    %10 = arith.extui %9 : i1 to i32
    %c0_i32_9 = arith.constant 0 : i32
    %11 = arith.cmpi ne, %10, %c0_i32_9 : i32
    scf.if %11 {
      %c0_10 = arith.constant 0 : index
      %c0_11 = arith.constant 0 : index
      %12 = vector.load %arg7[%c0_10, %c0_11] : memref<32x96xf32, #tpu.memory_space<vmem>>, vector<32x96xf32>
      %c0_12 = arith.constant 0 : index
      %c0_13 = arith.constant 0 : index
      %13 = vector.load %arg5[%c0_12, %c0_13] : memref<1x96xf32, #tpu.memory_space<vmem>>, vector<1x96xf32>
      %14 = vector.broadcast %13 : vector<1x96xf32> to vector<32x96xf32>
      %15 = arith.addf %12, %14 : vector<32x96xf32>
      %16 = arith.truncf %15 : vector<32x96xf32> to vector<32x96xbf16>
      %c0_14 = arith.constant 0 : index
      %c0_15 = arith.constant 0 : index
      %17 = vector.load %arg6[%c0_14, %c0_15] : memref<32x96xbf16, #tpu.memory_space<vmem>>, vector<32x96xbf16>
      tpu.vector_store %arg6[%c0_14, %c0_15], %16 {strides = array<i32>} : memref<32x96xbf16, #tpu.memory_space<vmem>>, vector<32x96xbf16>,
    } else {
    }
    return
  }
  func.func @transform_0(%arg0: i32, %arg1: i32, %arg2: i32) -> (i32, i32) {
    %c0_i32 = arith.constant 0 : i32
    return %arg0, %arg2 : i32, i32
  }
  func.func @transform_1(%arg0: i32, %arg1: i32, %arg2: i32) -> (i32, i32) {
    %c0_i32 = arith.constant 0 : i32
    return %arg2, %arg1 : i32, i32
  }
  func.func @transform_2(%arg0: i32, %arg1: i32, %arg2: i32) -> (i32, i32) {
    %c0_i32 = arith.constant 0 : i32
    %c0_i32_0 = arith.constant 0 : i32
    return %c0_i32, %arg1 : i32, i32
  }
  func.func @transform_3(%arg0: i32, %arg1: i32, %arg2: i32) -> (i32, i32) {
    %c0_i32 = arith.constant 0 : i32
    return %arg0, %arg1 : i32, i32
  }
}

</mosaic_0001>

<llo_original>
// kernel: tpu_custom_call.1
$region0: #{tpu_custom_call.1}
  #allocation0 [shape = 'u32[]', space=smem, size = 0x4, offset = 0x4, fixed_abs, tag = 'smem constant byte address 0x4 - core index']
  #allocation1 [shape = 'u32[144,128]{1,0:T(1,128)}', space=vmem, size = 0x12000, scoped, tag = 'internal scratch']
  #allocation2 [shape = 'f32[32,96]{1,0:T(8,128)}', space=vmem, size = 0x4000, scoped, tag = 'scratch operand']
  %s0 = inlined_call_operand.hbm [shape: bf16[32,32], index: 0, kind: input, shape index: {}]
  %s1 = inlined_call_operand.hbm [shape: bf16[32,96], index: 1, kind: input, shape index: {}]
  %s2 = inlined_call_operand.vmem [shape: f32[1,96], index: 2, kind: input, shape index: {}]
  %s3 = inlined_call_operand.hbm [shape: bf16[32,96], index: 3, kind: output, shape index: {}]
  %s4 = sld [smem:[#allocation0]]
  $region38: #{tpu_custom_call.1} parent=0
    _
  %s6 = ssub.s32 1, %s4
  %s7 = scalar_select 0, %s6, %s4
  $region1: #{tpu_custom_call.1} parent=0
    #allocation3 [shape = 'u8[8192]{0}', space=vmem, size = 0x2000, scoped, tag = 'input window, operand 0, single buffered']
    #allocation4 [shape = 's32[1]{0}', space=sflag, size = 0x4, scoped, tag = 'scoped memory for tpu_custom_call.1']
    #allocation5 [shape = 's32[1]{0}', space=sflag, size = 0x4, scoped, tag = 'scoped memory for tpu_custom_call.1']
    #allocation6 [shape = 'u8[8192]{0}', space=vmem, size = 0x2000, scoped, tag = 'input window, operand 1, single buffered']
    #allocation7 [shape = 's32[1]{0}', space=sflag, size = 0x4, scoped, tag = 'scoped memory for tpu_custom_call.1']
    #allocation8 [shape = 'u8[8192]{0}', space=vmem, size = 0x2000, scoped, tag = 'output window, operand 0, single buffered']
    %8 = vsyncpa [#allocation4], 0
    %9 = vsyncpa [#allocation7], 0
    %10 = vsyncpa [#allocation5], 0
    // Predicated region
    $region2: #{tpu_custom_call.1} parent=1 // pred_check
      _
    $region3: #{tpu_custom_call.1} parent=1 // pred_check_branch
      %12 = sbr.rel (0) target = $region5
    $region4: #{tpu_custom_call.1} parent=1 // pred_region
      %s14 = ssub.s32 256, 256
      %15 = vsyncadd [#allocation4], %s14
      %s16 = sshll.u32 [#allocation3], 4
      %s17 = int_to_ptr.vmem [resolvable:$true] %s16
      %22 = dma.hbm_to_vmem [thread:$0]  %s0, 256, %s17, [#allocation4], 64, 64, 4
    $region5: #{tpu_custom_call.1} parent=1 // pred_fallthru
      _
    // Predicated region
    $region6: #{tpu_custom_call.1} parent=1 // pred_check
      _
    $region7: #{tpu_custom_call.1} parent=1 // pred_check_branch
      %24 = sbr.rel (0) target = $region9
    $region8: #{tpu_custom_call.1} parent=1 // pred_region
      %s26 = ssub.s32 256, 256
      %27 = vsyncadd [#allocation7], %s26
      %s28 = sshll.u32 [#allocation6], 4
      %s29 = int_to_ptr.vmem [resolvable:$true] %s28
      %34 = dma.hbm_to_vmem [thread:$0]  %s1, 256, %s29, [#allocation7], 64, 64, 4
    $region9: #{tpu_custom_call.1} parent=1 // pred_fallthru
      _
    // Predicated region
    $region10: #{tpu_custom_call.1} parent=1 // pred_check
      _
    $region11: #{tpu_custom_call.1} parent=1 // pred_check_branch
      %36 = sbr.rel (0) target = $region13
    $region12: #{tpu_custom_call.1} parent=1 // pred_region
      _
    $region13: #{tpu_custom_call.1} parent=1 // pred_fallthru
      _
    // Predicated region
    $region14: #{tpu_custom_call.1} parent=1 // pred_check
      _
    $region15: #{tpu_custom_call.1} parent=1 // pred_check_branch
      %38 = sbr.rel (0) target = $region17
    $region16: #{tpu_custom_call.1} parent=1 // pred_region
      %39 = dma.done [#allocation4], 256
    $region17: #{tpu_custom_call.1} parent=1 // pred_fallthru
      _
    // Predicated region
    $region18: #{tpu_custom_call.1} parent=1 // pred_check
      _
    $region19: #{tpu_custom_call.1} parent=1 // pred_check_branch
      %41 = sbr.rel (0) target = $region21
    $region20: #{tpu_custom_call.1} parent=1 // pred_region
      %42 = dma.done [#allocation7], 256
    $region21: #{tpu_custom_call.1} parent=1 // pred_fallthru
      _
    %p44 = scmp.eq.s32.totalorder 0, 0
    // Predicated region
    $region22: #{tpu_custom_call.1} parent=1 // pred_check
      %p45 = pneg %p44
    $region23: #{tpu_custom_call.1} parent=1 // pred_check_branch
      %47 = sbr.rel (%p45) target = $region25
    $region24: #{tpu_custom_call.1} parent=1 // pred_region
      %vm48 = vcmask 785408
      %49 = vst.msk [vmem:[#allocation2] sm:$0xff] %vm48, 0.0
      %50 = vst.msk [vmem:[#allocation2 + $0x8] sm:$0xff] %vm48, 0.0
      %51 = vst.msk [vmem:[#allocation2 + $0x10] sm:$0xff] %vm48, 0.0
      %52 = vst.msk [vmem:[#allocation2 + $0x18] sm:$0xff] %vm48, 0.0
    $region25: #{tpu_custom_call.1} parent=1 // pred_fallthru
      _
    %v53 = vld [vmem:[#allocation2] sm:$0xff]
    %v54 = vld [vmem:[#allocation2 + $0x8] sm:$0xff]
    %v55 = vld [vmem:[#allocation2 + $0x10] sm:$0xff]
    %v56 = vld [vmem:[#allocation2 + $0x18] sm:$0xff]
    %v57 = vld [vmem:[#allocation3] sm:$0xf]
    %v58 = vld [vmem:[#allocation3 + $0x4] sm:$0xf]
    %v59 = vld [vmem:[#allocation3 + $0x8] sm:$0xf]
    %v60 = vld [vmem:[#allocation3 + $0xc] sm:$0xf]
    %v61 = vld [vmem:[#allocation6] sm:$0xf]
    %v62 = vld [vmem:[#allocation6 + $0x4] sm:$0xf]
    %v63 = vld [vmem:[#allocation6 + $0x8] sm:$0xf]
    %v64 = vld [vmem:[#allocation6 + $0xc] sm:$0xf]
    %v69 = vunpack.c.l.b16 %v57
    %v70 = vunpack.c.l.b16 %v58
    %v71 = vunpack.c.l.b16 %v59
    %v72 = vunpack.c.l.b16 %v60
    %v73 = vpack.c.b16 %v70, %v69
    %v74 = vpack.c.b16 %v72, %v71
    %v79 = vunpack.c.l.b16 %v61
    %v80 = vunpack.c.l.b16 %v62
    %v81 = vunpack.c.l.b16 %v63
    %v82 = vunpack.c.l.b16 %v64
    %v83 = vpack.c.b16 %v80, %v79
    %v84 = vpack.c.b16 %v82, %v81
    %vm87 = vcmask 261120
    %v89 = vsel %vm87, %v73, 0
    %v92 = vsel %vm87, %v74, 0
    %94 = vmatprep.subr.bf16.mxu0 0
    %95 = vmatpush1.bf16.msra.mxu0 %v83
    %96 = vmatprep.subr.bf16.mxu0 0
    %97 = vmatpush1.bf16.msra.mxu0 %v84
    %98 = vmatprep.subr.bf16.mxu0 0
    %99 = vmatpush1.bf16.msra.mxu0 0
    %100 = vmatprep.subr.bf16.mxu0 0
    %101 = vmatpush1.bf16.msra.mxu0 0
    %102 = vmatprep.subr.bf16.mxu0 0
    %103 = vmatpush1.bf16.msra.mxu0 0
    %104 = vmatprep.subr.bf16.mxu0 0
    %105 = vmatpush1.bf16.msra.mxu0 0
    %106 = vmatprep.subr.bf16.mxu0 0
    %107 = vmatpush1.bf16.msra.mxu0 0
    %108 = vmatprep.subr.bf16.mxu0 0
    %109 = vmatpush1.bf16.msra.mxu0 0
    %110 = vmatprep.subr.bf16.mxu0 0
    %111 = vmatpush1.bf16.msra.mxu0 0
    %112 = vmatprep.subr.bf16.mxu0 0
    %113 = vmatpush1.bf16.msra.mxu0 0
    %114 = vmatprep.subr.bf16.mxu0 0
    %115 = vmatpush1.bf16.msra.mxu0 0
    %116 = vmatprep.subr.bf16.mxu0 0
    %117 = vmatpush1.bf16.msra.mxu0 0
    %118 = vmatprep.subr.bf16.mxu0 0
    %119 = vmatpush1.bf16.msra.mxu0 0
    %120 = vmatprep.subr.bf16.mxu0 0
    %121 = vmatpush1.bf16.msra.mxu0 0
    %122 = vmatprep.subr.bf16.mxu0 0
    %123 = vmatpush1.bf16.msra.mxu0 0
    %124 = vmatprep.subr.bf16.mxu0 0
    %125 = vmatpush1.bf16.msra.mxu0 0
    %126 = vmatprep.mubr.bf16.mxu0 0
    %127 = vmatmul.mubr.bf16.gmra.mrb[0].mxu0 %v89
    %v128 = vpop.f32.mrb[0].mxu0
    %v129 = vadd.f32 0.0, %v128
    %v130 = vpop.f32.mrb[0].mxu0
    %v131 = vpop.f32.mrb[0].mxu0
    %v132 = vadd.f32 0.0, %v131
    %v133 = vpop.f32.mrb[0].mxu0
    %134 = vmatprep.mubr.bf16.mxu0 0
    %135 = vmatmul.mubr.bf16.gmra.mrb[0].mxu0 %v92
    %v136 = vpop.f32.mrb[0].mxu0
    %v137 = vadd.f32 0.0, %v136
    %v138 = vpop.f32.mrb[0].mxu0
    %v139 = vpop.f32.mrb[0].mxu0
    %v140 = vadd.f32 0.0, %v139
    %v141 = vpop.f32.mrb[0].mxu0
    %142 = vdwg.mxu0
    %v143 = vadd.f32 %v53, %v129
    %v144 = vadd.f32 %v54, %v132
    %v145 = vadd.f32 %v55, %v137
    %v146 = vadd.f32 %v56, %v140
    %vm147 = vcmask 785408
    %148 = vst.msk [vmem:[#allocation2] sm:$0xff] %vm147, %v143
    %149 = vst.msk [vmem:[#allocation2 + $0x8] sm:$0xff] %vm147, %v144
    %150 = vst.msk [vmem:[#allocation2 + $0x10] sm:$0xff] %vm147, %v145
    %151 = vst.msk [vmem:[#allocation2 + $0x18] sm:$0xff] %vm147, %v146
    // Predicated region
    $region26: #{tpu_custom_call.1} parent=1 // pred_check
      %p152 = pneg %p44
    $region27: #{tpu_custom_call.1} parent=1 // pred_check_branch
      %154 = sbr.rel (%p152) target = $region29
    $region28: #{tpu_custom_call.1} parent=1 // pred_region
      %v155 = vld [vmem:[#allocation2] sm:$0xff]
      %v156 = vld [vmem:[#allocation2 + $0x8] sm:$0xff]
      %v157 = vld [vmem:[#allocation2 + $0x10] sm:$0xff]
      %v158 = vld [vmem:[#allocation2 + $0x18] sm:$0xff]
      %v159 = vld [vmem:[%s2] sm:$0x1]
      %v161 = vlaneseq
      %v162 = vshrl.u32 %v161, 7
      %v163 = vsub.s32 0, %v162
      %v164 = vrot.slane %v159, %v163
      %v166 = vadd.f32 %v155, %v164
      %v167 = vadd.f32 %v156, %v164
      %v168 = vadd.f32 %v157, %v164
      %v169 = vadd.f32 %v158, %v164
      %v170 = vpack.c.bf16 %v167, %v166
      %v171 = vpack.c.bf16 %v169, %v168
      %v174 = vunpack.c.l.b16 %v170
      %v175 = vunpack.c.h.b16 %v170
      %v176 = vunpack.c.l.b16 %v171
      %v177 = vunpack.c.h.b16 %v171
      %v178 = vpack.c.b16 %v174, %v174
      %v179 = vpack.c.b16 %v175, %v175
      %v180 = vpack.c.b16 %v176, %v176
      %v181 = vpack.c.b16 %v177, %v177
      %vm186 = vcmask 781312
      %187 = vst.msk [vmem:[#allocation8] sm:$0xf] %vm186, %v178
      %188 = vst.msk [vmem:[#allocation8 + $0x4] sm:$0xf] %vm186, %v179
      %189 = vst.msk [vmem:[#allocation8 + $0x8] sm:$0xf] %vm186, %v180
      %190 = vst.msk [vmem:[#allocation8 + $0xc] sm:$0xf] %vm186, %v181
    $region29: #{tpu_custom_call.1} parent=1 // pred_fallthru
      _
    // Predicated region
    $region30: #{tpu_custom_call.1} parent=1 // pred_check
      _
    $region31: #{tpu_custom_call.1} parent=1 // pred_check_branch
      %192 = sbr.rel (0) target = $region33
    $region32: #{tpu_custom_call.1} parent=1 // pred_region
      %s194 = ssub.s32 256, 256
      %195 = vsyncadd [#allocation5], %s194
      %s196 = sshll.u32 [#allocation8], 4
      %s197 = int_to_ptr.vmem [resolvable:$true] %s196
      %202 = dma.vmem_to_hbm [thread:$0]  %s197, 256, %s3, [#allocation5], 64, 64, 4
    $region33: #{tpu_custom_call.1} parent=1 // pred_fallthru
      _
    // Predicated region
    $region34: #{tpu_custom_call.1} parent=1 // pred_check
      _
    $region35: #{tpu_custom_call.1} parent=1 // pred_check_branch
      %204 = sbr.rel (0) target = $region37
    $region36: #{tpu_custom_call.1} parent=1 // pred_region
      %205 = dma.done [#allocation5], 256
    $region37: #{tpu_custom_call.1} parent=1 // pred_fallthru
      _
    %206 = vsyncpa [#allocation4], 1
    %207 = vsyncpa [#allocation7], 1
    %208 = vsyncpa [#allocation5], 1

</llo_original>
